<compile_context>
chip_gen: v7x
topology: tpu7x:2x2x1
jax: 0.10.0
libtpu: 0.0.40
codegen_flags: <defaults>
</compile_context>

<pallas_src>
import functools

import jax
import jax.numpy as jnp
from jax import lax
from jax.experimental import pallas as pl
from jax.experimental.pallas import tpu as pltpu


# Non-center taps of the 3x3 depthwise conv, in a fixed order shared by the
# kernel and the precomputed border masks.
_TAPS = ((-1, -1), (-1, 0), (-1, 1),
         (0, -1),           (0, 1),
         (1, -1),  (1, 0),  (1, 1))


# ----------------------------------------------------------------------------
# Tiny one-time probe: determine pltpu.roll's rotation convention relative to
# np.roll, so the depthwise shift direction is provably correct.
# ----------------------------------------------------------------------------
@functools.lru_cache(maxsize=None)
def _roll_matches_numpy() -> bool:
    def probe(x_ref, o_ref):
        o_ref[...] = pltpu.roll(x_ref[...], 1, 1)

    x = jnp.arange(8 * 128, dtype=jnp.float32).reshape(8, 128)
    y = pl.pallas_call(
        probe, out_shape=jax.ShapeDtypeStruct((8, 128), jnp.float32))(x)
    # np.roll(x, 1, axis=1)[0, 1] == x[0, 0]
    return bool(y[0, 1] == x[0, 0])


@functools.lru_cache(maxsize=None)
def _default_vpu_threshold() -> int:
    """VPU-vs-MXU crossover for the 1x1 convs, tuned per TPU generation."""
    try:
        kind = jax.devices()[0].device_kind.lower()
    except Exception:  # pragma: no cover
        return 16
    # v5e's 4x128x128 MXU loses to the unrolled VPU MAC up to ~Cb=32; the
    # 2x256x256 bf16 MXU on v6e/v7x wins much earlier.
    return 32 if "v5" in kind else 16


def _vmem_limit_bytes(C, HW, io_dtype) -> int:
    """Scoped-VMEM request sized from the footprint (not all of v7x's VMEM)."""
    Cb = C // 2
    io_b = jnp.dtype(io_dtype).itemsize
    blocks = 2 * 2 * C * HW * io_b                  # double-buffered in + out
    temps = 8 * Cb * HW * 4                         # live f32 intermediates
    consts = (8 * HW + 2 * Cb * Cb + 16 * Cb) * 4   # masks + folded weights
    total = blocks + temps + consts + (8 << 20)     # headroom
    return int(min(max(total, 16 << 20), 48 << 20))


# ----------------------------------------------------------------------------
# Pallas kernel: one batch element per grid step.
#   input  x: (2*Cb, HW)  -- channels on sublanes, flattened spatial on lanes
#     x[:Cb]  -> passthrough (x1), copied in the I/O dtype
#     x[Cb:]  -> 1x1 conv(+BN) -> ReLU -> depthwise 3x3(+BN) -> 1x1 conv(+BN)
#                -> ReLU
#   output o: (Cb, 2*HW) -- row i = [x1_i | z_i]; byte-identical to the
#             channel_shuffle(groups=2) interleaved (2*Cb, H, W) tensor.
# ----------------------------------------------------------------------------
def _inverted_residual_kernel(masks_ref, x_ref, w1_ref, b1_ref, wd_ref, bd_ref,
                              w2_ref, b2_ref, o_ref, *, H, W, Cb,
                              vpu_threshold, mxu_bf16, roll_like_numpy):
    HW = H * W

    # --- x1 passthrough: stays in the I/O dtype, one dense store -------------
    o_ref[0, :, 0:HW] = x_ref[0, 0:Cb, :]

    # --- branch2 input --------------------------------------------------------
    x2 = x_ref[0, Cb:2 * Cb, :].astype(jnp.float32)          # (Cb, HW)

    def pointwise(w, xin, b):
        # w: (Cb, Cb) f32; xin: (Cb, HW) f32; b: (Cb, 1) f32
        if Cb <= vpu_threshold:
            # Unrolled VPU outer-product MAC: better than a <6%-utilized MXU
            # matmul at small channel counts.
            acc = jnp.zeros((Cb, HW), jnp.float32)
            for cin in range(Cb):
                acc = acc + w[:, cin:cin + 1] * xin[cin:cin + 1, :]
            return acc + b
        if mxu_bf16:
            # bf16 operands run the MXU at its native rate; f32 accumulate.
            return jnp.dot(w.astype(jnp.bfloat16), xin.astype(jnp.bfloat16),
                           preferred_element_type=jnp.float32) + b
        return jnp.dot(w, xin, preferred_element_type=jnp.float32) + b

    # --- pointwise conv 1 (+folded BN) + ReLU ---------------------------------
    y = jnp.maximum(pointwise(w1_ref[...], x2, b1_ref[...]), 0.0)

    # --- depthwise 3x3, stride 1, pad 1 (+folded BN) ---------------------------
    # Shift along the flattened-spatial lane axis with pltpu.roll (XLU slot,
    # otherwise idle) and kill the padded border / wraparound contributions
    # with precomputed 0/1 masks (hoisted VMEM input, one multiply per tap).
    wd = wd_ref[...]                          # (9, Cb, 1) tap-major, hoisted
    masks = masks_ref[...]                    # (8, HW) f32 0/1, hoisted
    acc = y * wd[4]                           # center tap: no shift, no mask
    for t, (dr, dc) in enumerate(_TAPS):
        off = dr * W + dc                     # want src[p] = y[p + off]
        amt = (-off) % HW if roll_like_numpy else off % HW
        src = pltpu.roll(y, amt, 1) * masks[t:t + 1, :]
        acc = acc + src * wd[(dr + 1) * 3 + (dc + 1)]
    acc = acc + bd_ref[...]                   # (Cb, 1) broadcast

    # --- pointwise conv 2 (+folded BN) + ReLU ----------------------------------
    z = jnp.maximum(pointwise(w2_ref[...], acc, b2_ref[...]), 0.0)

    # --- fused concat + channel_shuffle(groups=2) ------------------------------
    # One dense lane-offset store; the (Cb, 2*HW) output layout *is* the
    # interleaved channel order, so no per-channel stores and no wrapper pass.
    o_ref[0, :, HW:2 * HW] = z.astype(o_ref.dtype)


def _border_masks(H, W):
    """(8, HW) f32 0/1: per non-center tap, 1 where the source pixel exists."""
    rr = jnp.repeat(jnp.arange(H, dtype=jnp.int32), W)
    cc = jnp.tile(jnp.arange(W, dtype=jnp.int32), H)
    rows = []
    for dr, dc in _TAPS:
        ok = jnp.ones((H * W,), jnp.bool_)
        if dr == -1:
            ok = jnp.logical_and(ok, rr >= 1)
        elif dr == 1:
            ok = jnp.logical_and(ok, rr <= H - 2)
        if dc == -1:
            ok = jnp.logical_and(ok, cc >= 1)
        elif dc == 1:
            ok = jnp.logical_and(ok, cc <= W - 2)
        rows.append(ok)
    return jnp.stack(rows, axis=0).astype(jnp.float32)


@functools.partial(jax.jit, static_argnames=("H", "W", "vpu_threshold",
                                              "mxu_bf16", "roll_like_numpy"))
def _forward_flat(x_flat, kp, *, H, W, vpu_threshold, mxu_bf16,
                  roll_like_numpy):
    """x_flat: (B, 2*Cb, H*W); returns (B, Cb, 2*H*W) -- byte-identical to the
    channel-shuffled (B, 2*Cb, H, W) output (free reshape in the wrapper)."""
    B, C, HW = x_flat.shape
    assert HW == H * W
    Cb = C // 2

    masks = _border_masks(H, W)               # (8, HW), loop-invariant

    kern = functools.partial(
        _inverted_residual_kernel, H=H, W=W, Cb=Cb,
        vpu_threshold=vpu_threshold, mxu_bf16=mxu_bf16,
        roll_like_numpy=roll_like_numpy)

    return pl.pallas_call(
        kern,
        out_shape=jax.ShapeDtypeStruct((B, Cb, 2 * HW), x_flat.dtype),
        grid=(B,),
        in_specs=[
            pl.BlockSpec((8, HW), lambda b: (0, 0)),            # border masks
            pl.BlockSpec((1, C, HW), lambda b: (b, 0, 0)),      # activations
            pl.BlockSpec(kp["w1"].shape, lambda b: (0, 0)),     # (Cb, Cb)
            pl.BlockSpec(kp["b1"].shape, lambda b: (0, 0)),     # (Cb, 1)
            pl.BlockSpec(kp["wd"].shape, lambda b: (0, 0, 0)),  # (9, Cb, 1)
            pl.BlockSpec(kp["bd"].shape, lambda b: (0, 0)),     # (Cb, 1)
            pl.BlockSpec(kp["w2"].shape, lambda b: (0, 0)),     # (Cb, Cb)
            pl.BlockSpec(kp["b2"].shape, lambda b: (0, 0)),     # (Cb, 1)
        ],
        out_specs=pl.BlockSpec((1, Cb, 2 * HW), lambda b: (b, 0, 0)),
        compiler_params=pltpu.CompilerParams(
            # On v7x (2 TCs) keep B >= 2 so both cores are fed.
            dimension_semantics=("parallel",),
            vmem_limit_bytes=_vmem_limit_bytes(C, HW, x_flat.dtype)),
    )(masks, x_flat, kp["w1"], kp["b1"], kp["wd"], kp["bd"], kp["w2"],
      kp["b2"])


# ----------------------------------------------------------------------------
# Parameter setup / BN folding (glue, plain JAX)
# ----------------------------------------------------------------------------
def _fold_bn_pointwise(w, b, gamma, beta, mean, var, eps=1e-5):
    # w: (Cout, Cin), b: (Cout,)
    scale = gamma / jnp.sqrt(var + eps)
    return w * scale[:, None], (b - mean) * scale + beta


def _fold_bn_depthwise(w, b, gamma, beta, mean, var, eps=1e-5):
    # w: (C, 1, 3, 3), b: (C,)
    scale = gamma / jnp.sqrt(var + eps)
    return w * scale[:, None, None, None], (b - mean) * scale + beta


def make_params(key, branch_features):
    """Deterministic synthetic parameters for branch2 (stride=1)."""
    Cb = branch_features
    ks = jax.random.split(key, 18)
    n = lambda k, s: (0.2 * jax.random.normal(k, s)).astype(jnp.float32)
    pos = lambda k, s: jax.random.uniform(k, s, jnp.float32, 0.5, 1.5)
    return dict(
        # conv 1x1 -> BN -> ReLU
        w1=n(ks[0], (Cb, Cb, 1, 1)), b1=n(ks[1], (Cb,)),
        g1=pos(ks[2], (Cb,)), be1=n(ks[3], (Cb,)),
        m1=n(ks[4], (Cb,)), v1=pos(ks[5], (Cb,)),
        # depthwise 3x3 -> BN
        wd=n(ks[6], (Cb, 1, 3, 3)), bd=n(ks[7], (Cb,)),
        gd=pos(ks[8], (Cb,)), bed=n(ks[9], (Cb,)),
        md=n(ks[10], (Cb,)), vd=pos(ks[11], (Cb,)),
        # conv 1x1 -> BN -> ReLU
        w2=n(ks[12], (Cb, Cb, 1, 1)), b2=n(ks[13], (Cb,)),
        g2=pos(ks[14], (Cb,)), be2=n(ks[15], (Cb,)),
        m2=n(ks[16], (Cb,)), v2=pos(ks[17], (Cb,)),
    )


def prepare_kernel_params(p):
    Cb = p["b1"].shape[0]
    w1, b1 = _fold_bn_pointwise(p["w1"][:, :, 0, 0], p["b1"],
                                p["g1"], p["be1"], p["m1"], p["v1"])
    wd, bd = _fold_bn_depthwise(p["wd"], p["bd"],
                                p["gd"], p["bed"], p["md"], p["vd"])
    w2, b2 = _fold_bn_pointwise(p["w2"][:, :, 0, 0], p["b2"],
                                p["g2"], p["be2"], p["m2"], p["v2"])
    return dict(
        w1=w1,                                           # (Cout, Cin)
        b1=b1.reshape(Cb, 1),
        wd=wd[:, 0].reshape(Cb, 9).T.reshape(9, Cb, 1),  # tap-major, ch sublane
        bd=bd.reshape(Cb, 1),
        w2=w2,
        b2=b2.reshape(Cb, 1),
    )


# ----------------------------------------------------------------------------
# Public forward (stride=1 InvertedResidual), NCHW in / NCHW out.
# Production defaults per perf review: bf16 MXU operands; pass
# io_dtype=jnp.bfloat16 to also halve HBM traffic (f32 accumulation inside).
# ----------------------------------------------------------------------------
def inverted_residual_forward(x_nchw, kp, io_dtype=jnp.float32, *,
                              mxu_bf16=True, vpu_threshold=None):
    B, C, H, W = x_nchw.shape
    if vpu_threshold is None:
        vpu_threshold = _default_vpu_threshold()
    x_flat = x_nchw.reshape(B, C, H * W).astype(io_dtype)
    out_flat = _forward_flat(x_flat, kp, H=H, W=W,
                             vpu_threshold=int(vpu_threshold),
                             mxu_bf16=bool(mxu_bf16),
                             roll_like_numpy=_roll_matches_numpy())
    # (B, Cb, 2*HW) -> (B, 2*Cb, H, W) is a pure metadata reshape (the bytes
    # are already in channel-shuffled order).
    return out_flat.reshape(B, C, H, W)


# ----------------------------------------------------------------------------
# Pure-JAX reference (NCHW, unfused conv + eval-mode BN) for validation.
# ----------------------------------------------------------------------------
def reference_forward(x, p):
    B, C, H, W = x.shape
    Cb = C // 2
    dn = ("NCHW", "OIHW", "NCHW")

    def bn(y, g, b, m, v, eps=1e-5):
        sh = (1, -1, 1, 1)
        return (y - m.reshape(sh)) / jnp.sqrt(v + eps).reshape(sh) \
            * g.reshape(sh) + b.reshape(sh)

    x1, x2 = x[:, :Cb], x[:, Cb:]
    y = lax.conv_general_dilated(x2, p["w1"], (1, 1), "VALID",
                                 dimension_numbers=dn)
    y = y + p["b1"].reshape(1, -1, 1, 1)
    y = jax.nn.relu(bn(y, p["g1"], p["be1"], p["m1"], p["v1"]))

    y = lax.conv_general_dilated(y, p["wd"], (1, 1), ((1, 1), (1, 1)),
                                 dimension_numbers=dn, feature_group_count=Cb)
    y = y + p["bd"].reshape(1, -1, 1, 1)
    y = bn(y, p["gd"], p["bed"], p["md"], p["vd"])

    y = lax.conv_general_dilated(y, p["w2"], (1, 1), "VALID",
                                 dimension_numbers=dn)
    y = y + p["b2"].reshape(1, -1, 1, 1)
    y = jax.nn.relu(bn(y, p["g2"], p["be2"], p["m2"], p["v2"]))

    out = jnp.concatenate([x1, y], axis=1)
    # channel_shuffle(out, groups=2)
    out = out.reshape(B, 2, Cb, H, W).transpose(0, 2, 1, 3, 4)
    return out.reshape(B, 2 * Cb, H, W)


if __name__ == "__main__":
    key = jax.random.PRNGKey(0)
    k_x, k_p, k_x2, k_p2 = jax.random.split(key, 4)

    # ---- config A: tiny channels (exercises the VPU pointwise path) --------
    B, C, H, W = 2, 8, 16, 16          # stride=1: in_channels == out_channels
    Cb = C // 2
    x = jax.random.normal(k_x, (B, C, H, W), jnp.float32)
    params = make_params(k_p, Cb)
    kparams = prepare_kernel_params(params)
    ref = reference_forward(x, params)

    # f32 I/O, exact f32 math -> tight check against the unfused reference.
    out = inverted_residual_forward(x, kparams, io_dtype=jnp.float32,
                                    mxu_bf16=False, vpu_threshold=32)
    out = jax.block_until_ready(out)
    assert out.shape == (B, C, H, W), out.shape
    err = float(jnp.max(jnp.abs(out - ref)))
    assert jnp.allclose(out, ref, atol=1e-4, rtol=1e-4), err

    # bf16 activation I/O (production default on v6e/v7x), looser tolerance.
    out_bf16 = inverted_residual_forward(x, kparams, io_dtype=jnp.bfloat16,
                                         vpu_threshold=32)
    out_bf16 = jax.block_until_ready(out_bf16).astype(jnp.float32)
    err16 = float(jnp.max(jnp.abs(out_bf16 - ref)))
    assert jnp.allclose(out_bf16, ref, atol=5e-2, rtol=5e-2), err16

    # ---- config B: larger channels (exercises the MXU pointwise path) ------
    B2, C2, H2, W2 = 2, 64, 16, 16
    Cb2 = C2 // 2
    x2 = jax.random.normal(k_x2, (B2, C2, H2, W2), jnp.float32)
    params2 = make_params(k_p2, Cb2)
    kparams2 = prepare_kernel_params(params2)
    ref2 = reference_forward(x2, params2)

    # f32 I/O, f32 MXU operands.
    out2 = inverted_residual_forward(x2, kparams2, io_dtype=jnp.float32,
                                     mxu_bf16=False, vpu_threshold=0)
    out2 = jax.block_until_ready(out2)
    err2 = float(jnp.max(jnp.abs(out2 - ref2)))
    assert jnp.allclose(out2, ref2, atol=3e-2, rtol=3e-2), err2

    # Production path: bf16 activation I/O + bf16 MXU operands (f32 accum).
    out2p = inverted_residual_forward(x2, kparams2, io_dtype=jnp.bfloat16,
                                      mxu_bf16=True, vpu_threshold=0)
    out2p = jax.block_until_ready(out2p).astype(jnp.float32)
    err2p = float(jnp.max(jnp.abs(out2p - ref2)))
    assert jnp.allclose(out2p, ref2, atol=2e-1, rtol=1e-1), err2p

    print("KERNEL_OK")
</pallas_src>

<mosaic_0001>
module attributes {stable_mosaic.version = 11 : i64} {
  func.func @probe(%arg0: memref<8x128xf32, #tpu.memory_space<vmem>>, %arg1: memref<8x128xf32, #tpu.memory_space<vmem>>) attributes {dimension_semantics = [], scalar_prefetch = 0 : i64, scratch_operands = 0 : i64, tpu.core_type = #tpu.core_type<tc>} {
    %c0 = arith.constant 0 : index
    %c0_0 = arith.constant 0 : index
    %0 = vector.load %arg0[%c0, %c0_0] : memref<8x128xf32, #tpu.memory_space<vmem>>, vector<8x128xf32>
    %c1_i32 = arith.constant 1 : i32
    %1 = tpu.dynamic_rotate %0 by %c1_i32 dim 1 : vector<8x128xf32>, i32 -> vector<8x128xf32>
    %c0_1 = arith.constant 0 : index
    %c0_2 = arith.constant 0 : index
    %2 = vector.load %arg1[%c0_1, %c0_2] : memref<8x128xf32, #tpu.memory_space<vmem>>, vector<8x128xf32>
    tpu.vector_store %arg1[%c0_1, %c0_2], %1 {strides = array<i32>} : memref<8x128xf32, #tpu.memory_space<vmem>>, vector<8x128xf32>,
    return
  }
}

</mosaic_0001>

<llo_original>
// kernel: tpu_custom_call.1
$region0: #{tpu_custom_call.1}
  #allocation0 [shape = 'u32[]', space=smem, size = 0x4, offset = 0x4, fixed_abs, tag = 'smem constant byte address 0x4 - core index']
  #allocation1 [shape = 'u32[144,128]{1,0:T(1,128)}', space=vmem, size = 0x12000, scoped, tag = 'internal scratch']
  %s0 = inlined_call_operand.hbm [shape: f32[8,128], index: 0, kind: input, shape index: {}]
  %s1 = inlined_call_operand.hbm [shape: f32[8,128], index: 1, kind: output, shape index: {}]
  %s2 = sld [smem:[#allocation0]]
  $region18: #{tpu_custom_call.1} parent=0
    _
  %s4 = ssub.s32 1, %s2
  %s5 = scalar_select 0, %s4, %s2
  $region1: #{tpu_custom_call.1} parent=0
    #allocation2 [shape = 'u8[4096]{0}', space=vmem, size = 0x1000, scoped, tag = 'input window, operand 0, single buffered']
    #allocation3 [shape = 's32[1]{0}', space=sflag, size = 0x4, scoped, tag = 'scoped memory for tpu_custom_call.1']
    #allocation4 [shape = 's32[1]{0}', space=sflag, size = 0x4, scoped, tag = 'scoped memory for tpu_custom_call.1']
    #allocation5 [shape = 'u8[4096]{0}', space=vmem, size = 0x1000, scoped, tag = 'output window, operand 0, single buffered']
    %6 = vsyncpa [#allocation3], 0
    %7 = vsyncpa [#allocation4], 0
    // Predicated region
    $region2: #{tpu_custom_call.1} parent=1 // pred_check
      _
    $region3: #{tpu_custom_call.1} parent=1 // pred_check_branch
      %9 = sbr.rel (0) target = $region5
    $region4: #{tpu_custom_call.1} parent=1 // pred_region
      %s11 = ssub.s32 128, 128
      %12 = vsyncadd [#allocation3], %s11
      %s14 = sshll.u32 [#allocation2], 4
      %s15 = int_to_ptr.vmem [resolvable:$true] %s14
      %17 = dma.hbm_to_vmem [thread:$0]  %s0, 128, %s15, [#allocation3]
    $region5: #{tpu_custom_call.1} parent=1 // pred_fallthru
      _
    // Predicated region
    $region6: #{tpu_custom_call.1} parent=1 // pred_check
      _
    $region7: #{tpu_custom_call.1} parent=1 // pred_check_branch
      %19 = sbr.rel (0) target = $region9
    $region8: #{tpu_custom_call.1} parent=1 // pred_region
      %20 = dma.done [#allocation3], 128
    $region9: #{tpu_custom_call.1} parent=1 // pred_fallthru
      _
    %v21 = vld [vmem:[#allocation2] sm:$0xff]
    %22 = vrot.lane.b32.xlu0 %v21, 1
    %v23 = vpop.permute.xlu0 %22
    %24 = vst [vmem:[#allocation5] sm:$0xff] %v23
    // Predicated region
    $region10: #{tpu_custom_call.1} parent=1 // pred_check
      _
    $region11: #{tpu_custom_call.1} parent=1 // pred_check_branch
      %26 = sbr.rel (0) target = $region13
    $region12: #{tpu_custom_call.1} parent=1 // pred_region
      %s28 = ssub.s32 128, 128
      %29 = vsyncadd [#allocation4], %s28
      %s31 = sshll.u32 [#allocation5], 4
      %s32 = int_to_ptr.vmem [resolvable:$true] %s31
      %34 = dma.vmem_to_hbm [thread:$0]  %s32, 128, %s1, [#allocation4]
    $region13: #{tpu_custom_call.1} parent=1 // pred_fallthru
      _
    // Predicated region
    $region14: #{tpu_custom_call.1} parent=1 // pred_check
      _
    $region15: #{tpu_custom_call.1} parent=1 // pred_check_branch
      %36 = sbr.rel (0) target = $region17
    $region16: #{tpu_custom_call.1} parent=1 // pred_region
      %37 = dma.done [#allocation4], 128
    $region17: #{tpu_custom_call.1} parent=1 // pred_fallthru
      _
    %38 = vsyncpa [#allocation3], 1
    %39 = vsyncpa [#allocation4], 1

</llo_original>
